<compile_context>
chip_gen: v6e
topology: v6e:2x2x1
jax: 0.10.0
libtpu: 0.0.40
codegen_flags: <defaults>
</compile_context>

<pallas_src>
import functools

import jax
import jax.numpy as jnp
from jax.experimental import pallas as pl
from jax.experimental.pallas import tpu as pltpu

LEAKY_SLOPE = 0.3
BN_EPS = 1e-5
LANE = 128
_VMEM_LIMIT = 48 * 1024 * 1024  # explicit budget; safe on v5e/v6e (128 MiB) and v7x (64 MiB)

_GEMM_ROW_TILE = 512       # A-tile rows for conv GEMMs
_ELTWISE_ROW_TILE = 1024   # row tile for elementwise kernels
_STFT_ROW_TILE = 256       # row tile for STFT magnitude kernel


def _round_up(x, m):
    return (x + m - 1) // m * m


def _pick_tile(m, cap):
    """Full-array block when it fits (no padding needed), otherwise a cap-sized tile
    (multiple of 8) with a masked/dropped partial last block."""
    return m if m <= cap else cap


def _cparams():
    return pltpu.CompilerParams(
        dimension_semantics=("parallel",),
        vmem_limit_bytes=_VMEM_LIMIT,
    )


# ----------------------------- Pallas kernels -----------------------------

def _conv_gemm_kernel(a_ref, b_ref, bias_ref, o_ref, *maybe_mom,
                      leaky, moments, rows, tm):
    """out = A @ B + bias (bf16 operands, f32 accumulate).
    Optionally fuses LeakyReLU epilogue and per-tile BN moment partials."""
    acc = jnp.dot(a_ref[...], b_ref[...], preferred_element_type=jnp.float32)
    acc = acc + bias_ref[...]
    if moments:
        mom_ref, = maybe_mom
        # Mask rows of the (possibly partial) last tile so garbage rows don't pollute stats.
        row = pl.program_id(0) * tm + jax.lax.broadcasted_iota(jnp.int32, acc.shape, 0)
        v = jnp.where(row < rows, acc, 0.0)
        s = jnp.sum(v, axis=0, keepdims=True)
        sq = jnp.sum(v * v, axis=0, keepdims=True)
        pad = jnp.zeros((6, acc.shape[1]), jnp.float32)
        mom_ref[...] = jnp.concatenate([s, sq, pad], axis=0)[None]
    if leaky:
        acc = jnp.where(acc >= 0.0, acc, LEAKY_SLOPE * acc)
    o_ref[...] = acc.astype(o_ref.dtype)


def pallas_conv_gemm(patches, w2d, bias, *, out_dtype=jnp.bfloat16,
                     leaky=False, moments=False):
    """patches:(M,K) bf16, w2d:(K,Cout) f32, bias:(Cout,) f32.
    Lane-dense: Cout is zero-padded to a multiple of 128 inside the call; the padded
    columns are sliced off before returning. Returns out (M,Cout) [, (sum, sumsq) per channel]."""
    M, K = patches.shape
    cout = w2d.shape[1]
    npad = _round_up(cout, LANE)
    w_p = jnp.zeros((K, npad), jnp.bfloat16).at[:, :cout].set(w2d.astype(jnp.bfloat16))
    b_p = jnp.zeros((1, npad), jnp.float32).at[:, :cout].set(
        bias.astype(jnp.float32)[None, :])
    tm = _pick_tile(M, _GEMM_ROW_TILE)
    grid = pl.cdiv(M, tm)

    out_shapes = [jax.ShapeDtypeStruct((M, npad), out_dtype)]
    out_specs = [pl.BlockSpec((tm, npad), lambda i: (i, 0))]
    if moments:
        out_shapes.append(jax.ShapeDtypeStruct((grid, 8, npad), jnp.float32))
        out_specs.append(pl.BlockSpec((1, 8, npad), lambda i: (i, 0, 0)))

    res = pl.pallas_call(
        functools.partial(_conv_gemm_kernel, leaky=leaky, moments=moments,
                          rows=M, tm=tm),
        out_shape=tuple(out_shapes) if moments else out_shapes[0],
        grid=(grid,),
        in_specs=[
            pl.BlockSpec((tm, K), lambda i: (i, 0)),
            pl.BlockSpec((K, npad), lambda i: (0, 0)),
            pl.BlockSpec((1, npad), lambda i: (0, 0)),
        ],
        out_specs=tuple(out_specs) if moments else out_specs[0],
        compiler_params=_cparams(),
    )(patches, w_p, b_p)

    if moments:
        out, mom = res
        ch_sum = jnp.sum(mom[:, 0, :cout], axis=0)
        ch_sq = jnp.sum(mom[:, 1, :cout], axis=0)
        return out[:, :cout], ch_sum, ch_sq
    return res[:, :cout]


def _stft_mag_kernel(f_ref, m_ref, o_ref, *, scale, fpad):
    prod = jnp.dot(f_ref[...], m_ref[...], preferred_element_type=jnp.float32)
    re = prod[:, :fpad]
    im = prod[:, fpad:]
    o_ref[...] = (jnp.sqrt(re * re + im * im) * scale).astype(o_ref.dtype)


def pallas_stft_magnitude(frames, dft_mat, scale, fpad):
    """frames:(M,n_fft) f32, dft_mat:(n_fft, 2*fpad) f32 (cos|sin, lane-padded)."""
    M, n_fft = frames.shape
    two_f = dft_mat.shape[1]
    tm = _pick_tile(M, _STFT_ROW_TILE)
    grid = pl.cdiv(M, tm)
    return pl.pallas_call(
        functools.partial(_stft_mag_kernel, scale=scale, fpad=fpad),
        out_shape=jax.ShapeDtypeStruct((M, fpad), jnp.bfloat16),
        grid=(grid,),
        in_specs=[pl.BlockSpec((tm, n_fft), lambda i: (i, 0)),
                  pl.BlockSpec((n_fft, two_f), lambda i: (0, 0))],
        out_specs=pl.BlockSpec((tm, fpad), lambda i: (i, 0)),
        compiler_params=_cparams(),
    )(frames, dft_mat)


def _bn_leaky_kernel(x_ref, s_ref, b_ref, o_ref):
    v = x_ref[...].astype(jnp.float32) * s_ref[...] + b_ref[...]
    o_ref[...] = jnp.where(v >= 0.0, v, LEAKY_SLOPE * v).astype(o_ref.dtype)


def pallas_bn_leaky(x2d, scale, shift, out_dtype=jnp.bfloat16):
    M, C = x2d.shape
    tm = _pick_tile(M, _ELTWISE_ROW_TILE)
    grid = pl.cdiv(M, tm)
    return pl.pallas_call(
        _bn_leaky_kernel,
        out_shape=jax.ShapeDtypeStruct((M, C), out_dtype),
        grid=(grid,),
        in_specs=[pl.BlockSpec((tm, C), lambda i: (i, 0)),
                  pl.BlockSpec((1, C), lambda i: (0, 0)),
                  pl.BlockSpec((1, C), lambda i: (0, 0))],
        out_specs=pl.BlockSpec((tm, C), lambda i: (i, 0)),
        compiler_params=_cparams(),
    )(x2d, scale, shift)


def _dual_bn_add_leaky_kernel(a_ref, sa_ref, ba_ref, y_ref, sy_ref, by_ref, o_ref):
    v = (a_ref[...].astype(jnp.float32) * sa_ref[...] + ba_ref[...]
         + y_ref[...].astype(jnp.float32) * sy_ref[...] + by_ref[...])
    o_ref[...] = jnp.where(v >= 0.0, v, LEAKY_SLOPE * v).astype(o_ref.dtype)


def pallas_dual_bn_add_leaky(a2d, sa, ba, y2d, sy, by, out_dtype=jnp.bfloat16):
    M, C = a2d.shape
    tm = _pick_tile(M, _ELTWISE_ROW_TILE)
    grid = pl.cdiv(M, tm)
    return pl.pallas_call(
        _dual_bn_add_leaky_kernel,
        out_shape=jax.ShapeDtypeStruct((M, C), out_dtype),
        grid=(grid,),
        in_specs=[pl.BlockSpec((tm, C), lambda i: (i, 0)),
                  pl.BlockSpec((1, C), lambda i: (0, 0)),
                  pl.BlockSpec((1, C), lambda i: (0, 0)),
                  pl.BlockSpec((tm, C), lambda i: (i, 0)),
                  pl.BlockSpec((1, C), lambda i: (0, 0)),
                  pl.BlockSpec((1, C), lambda i: (0, 0))],
        out_specs=pl.BlockSpec((tm, C), lambda i: (i, 0)),
        compiler_params=_cparams(),
    )(a2d, sa, ba, y2d, sy, by)


# ----------------------------- Model glue -----------------------------

def conv2d(x_nhwc, w_hwio, bias, stride=(1, 1), padding=None, pad_mode="constant",
           *, leaky=False, moments=False, out_dtype=jnp.bfloat16):
    """Conv2d via im2col (glue) + lane-dense bf16 Pallas GEMM. x: NHWC, w: (kh,kw,Cin,Cout)."""
    if padding is not None:
        x_nhwc = jnp.pad(x_nhwc, ((0, 0), padding[0], padding[1], (0, 0)), mode=pad_mode)
    kh, kw, cin, cout = w_hwio.shape
    B, H, W, C = x_nhwc.shape
    assert C == cin
    sh, sw = stride
    Ho = (H - kh) // sh + 1
    Wo = (W - kw) // sw + 1
    cols = []
    for i in range(kh):
        for j in range(kw):
            cols.append(x_nhwc[:, i:i + sh * (Ho - 1) + 1:sh,
                               j:j + sw * (Wo - 1) + 1:sw, :])
    patches = jnp.concatenate(cols, axis=-1).reshape(B * Ho * Wo, kh * kw * cin)
    patches = patches.astype(jnp.bfloat16)
    res = pallas_conv_gemm(patches, w_hwio.reshape(kh * kw * cin, cout), bias,
                           out_dtype=out_dtype, leaky=leaky, moments=moments)
    if moments:
        out, ch_sum, ch_sq = res
        return out.reshape(B, Ho, Wo, cout), ch_sum, ch_sq
    return res.reshape(B, Ho, Wo, cout)


def bn_scale_shift(ch_sum, ch_sq, count, gamma, beta):
    """Training-mode BatchNorm2d affine constants from fused GEMM moment partials
    (biased variance over (N,H,W), matching PyTorch normalization in training mode)."""
    mean = ch_sum / count
    var = jnp.maximum(ch_sq / count - mean * mean, 0.0)
    scale = gamma.astype(jnp.float32) * jax.lax.rsqrt(var + BN_EPS)
    shift = beta.astype(jnp.float32) - mean * scale
    return scale[None, :], shift[None, :]


def resnet2d_forward(x, p, stride):
    sh, sw = stride
    # conv0: 3x3 'same' (zero pad), stride 1, fused BN-moments -> bn0 affine + LeakyReLU
    h, s0, q0 = conv2d(x, p["w0"], p["b0"], stride=(1, 1),
                       padding=((1, 1), (1, 1)), pad_mode="constant", moments=True)
    B, H, W, C = h.shape
    cnt0 = B * H * W
    sc0, sh0 = bn_scale_shift(s0, q0, cnt0, p["g0"], p["be0"])
    h = pallas_bn_leaky(h.reshape(cnt0, C), sc0, sh0).reshape(B, H, W, C)
    # ReflectionPad2d([(sw+1)//2, (sw+2)//2, (sh+1)//2, (sh+2)//2]) + conv1 (fused moments)
    pad_h = ((sh + 1) // 2, (sh + 2) // 2)
    pad_w = ((sw + 1) // 2, (sw + 2) // 2)
    hp = jnp.pad(h, ((0, 0), pad_h, pad_w, (0, 0)), mode="reflect")
    a, s1, q1 = conv2d(hp, p["w1"], p["b1"], stride=stride, moments=True)
    # shortcut: conv2 (1x1, stride) on block input (fused moments)
    y, s2, q2 = conv2d(x, p["w2"], p["b2"], stride=stride, moments=True)
    Ba, Ha, Wa, Ca = a.shape
    cnt = Ba * Ha * Wa
    sc1, t1 = bn_scale_shift(s1, q1, cnt, p["g1"], p["be1"])
    sc2, t2 = bn_scale_shift(s2, q2, cnt, p["g2"], p["be2"])
    out = pallas_dual_bn_add_leaky(a.reshape(cnt, Ca), sc1, t1,
                                   y.reshape(cnt, Ca), sc2, t2)
    return out.reshape(Ba, Ha, Wa, Ca)


def stft_magnitude(x_bl, n_fft, hop_length):
    """torch.stft(..., normalized=True, onesided=True) magnitude.
    Defaults reproduced: center=True, pad_mode='reflect', win_length=n_fft, ones window.
    DFT matrix kept f32 (negligible FLOPs, accuracy-sensitive); single fused cos|sin matmul."""
    B, L = x_bl.shape
    pad = n_fft // 2
    xp = jnp.pad(x_bl, ((0, 0), (pad, pad)), mode="reflect")
    n_frames = (xp.shape[1] - n_fft) // hop_length + 1
    idx = jnp.arange(n_frames)[:, None] * hop_length + jnp.arange(n_fft)[None, :]
    frames = xp[:, idx].reshape(B * n_frames, n_fft).astype(jnp.float32)
    n_freq = n_fft // 2 + 1
    fpad = _round_up(n_freq, LANE)
    n = jnp.arange(n_fft, dtype=jnp.float32)[:, None]
    f = jnp.arange(n_freq, dtype=jnp.float32)[None, :]
    ang = 2.0 * jnp.pi * n * f / n_fft
    dft = jnp.zeros((n_fft, 2 * fpad), jnp.float32)
    dft = dft.at[:, :n_freq].set(jnp.cos(ang))
    dft = dft.at[:, fpad:fpad + n_freq].set(jnp.sin(ang))
    mag = pallas_stft_magnitude(frames, dft, float(n_fft) ** -0.5, fpad)
    mag = mag[:, :n_freq].reshape(B, n_frames, n_freq)
    # torch.stft -> (B, n_freq, n_frames); unsqueeze channel -> NHWC (B, freq, time, 1)
    return jnp.transpose(mag, (0, 2, 1))[..., None]


def stft_discriminator_forward(params, x, n_fft, hop_length):
    assert x.shape[1] == 1
    x = jnp.squeeze(x, axis=1).astype(jnp.float32)
    h = stft_magnitude(x, n_fft, hop_length)                     # (B, F, T, 1) bf16
    # Conv2d(1, n_channels, 7, padding='same') with fused LeakyReLU(0.3) epilogue
    h = conv2d(h, params["w_in"], params["b_in"], stride=(1, 1),
               padding=((3, 3), (3, 3)), pad_mode="constant", leaky=True)
    for blk in params["resnets"]:
        h = resnet2d_forward(h, blk, blk["stride"])
    # final Conv2d(16*n_channels, 1, kernel_size=(n, 1)) -> f32 output
    out = conv2d(h, params["w_out"], params["b_out"], stride=(1, 1),
                 out_dtype=jnp.float32)
    # NHWC -> NCHW to match the PyTorch output convention
    return jnp.transpose(out, (0, 3, 1, 2))


# ----------------------------- Deterministic init -----------------------------

def init_params(key, n_fft, n_channels):
    n = n_fft // 2 + 1
    for _ in range(6):
        n = (n - 1) // 2 + 1
    keys = iter(jax.random.split(key, 128))

    def conv_w(kh, kw, cin, cout):
        return 0.1 * jax.random.normal(next(keys), (kh, kw, cin, cout), jnp.float32)

    def conv_b(cout):
        return 0.05 * jax.random.normal(next(keys), (cout,), jnp.float32)

    def bn_g(c):
        return 1.0 + 0.05 * jax.random.normal(next(keys), (c,), jnp.float32)

    def bn_b(c):
        return 0.05 * jax.random.normal(next(keys), (c,), jnp.float32)

    params = {"w_in": conv_w(7, 7, 1, n_channels), "b_in": conv_b(n_channels)}
    cfgs = [
        (n_channels, 2, (2, 1)),
        (2 * n_channels, 2, (2, 2)),
        (4 * n_channels, 1, (2, 1)),
        (4 * n_channels, 2, (2, 2)),
        (8 * n_channels, 1, (2, 1)),
        (8 * n_channels, 2, (2, 2)),
    ]
    blocks = []
    for c, factor, (sh, sw) in cfgs:
        blocks.append({
            "w0": conv_w(3, 3, c, c), "b0": conv_b(c), "g0": bn_g(c), "be0": bn_b(c),
            "w1": conv_w(sh + 2, sw + 2, c, factor * c), "b1": conv_b(factor * c),
            "g1": bn_g(factor * c), "be1": bn_b(factor * c),
            "w2": conv_w(1, 1, c, factor * c), "b2": conv_b(factor * c),
            "g2": bn_g(factor * c), "be2": bn_b(factor * c),
            "stride": (sh, sw),
        })
    params["resnets"] = blocks
    params["w_out"] = conv_w(n, 1, 16 * n_channels, 1)
    params["b_out"] = conv_b(1)
    return params


# ----------------------------- Main -----------------------------

if __name__ == "__main__":
    key = jax.random.PRNGKey(0)
    k_in, k_p = jax.random.split(key)

    # small config consistent with the module: n_fft=128, hop=32, n_channels=4
    n_fft, hop_length, n_channels = 128, 32, 4
    B, L = 2, 256
    x = jax.random.normal(k_in, (B, 1, L), jnp.float32)

    params = init_params(k_p, n_fft=n_fft, n_channels=n_channels)
    out = stft_discriminator_forward(params, x, n_fft=n_fft, hop_length=hop_length)
    out = jax.block_until_ready(out)

    # freq collapses to 1 by the final (n,1) conv; time: 9 -> 9 -> 5 -> 5 -> 3 -> 3 -> 2
    assert out.shape == (B, 1, 1, 2), out.shape
    assert bool(jnp.all(jnp.isfinite(out)))
    print("KERNEL_OK")
</pallas_src>

<mosaic_0001>
module attributes {stable_mosaic.version = 11 : i64} {
  func.func @_stft_mag_kernel(%arg0: i32, %arg1: memref<18x128xf32, #tpu.memory_space<vmem>>, %arg2: memref<128x256xf32, #tpu.memory_space<vmem>>, %arg3: memref<18x128xbf16, #tpu.memory_space<vmem>>) attributes {dimension_semantics = [#tpu.dimension_semantics<parallel>], iteration_bounds = array<i64: 1>, scalar_prefetch = 0 : i64, scratch_operands = 0 : i64, tpu.core_type = #tpu.core_type<tc>, window_params = [{transform_indices = @transform_0, window_bounds = array<i64: 18, 128>}, {pipeline_mode = #tpu.pipeline_mode<synchronous>, transform_indices = @transform_1, window_bounds = array<i64: 128, 256>}, {transform_indices = @transform_2, window_bounds = array<i64: 18, 128>}]} {
    %c0 = arith.constant 0 : index
    %c0_0 = arith.constant 0 : index
    %0 = vector.load %arg1[%c0, %c0_0] : memref<18x128xf32, #tpu.memory_space<vmem>>, vector<18x128xf32>
    %c0_1 = arith.constant 0 : index
    %c0_2 = arith.constant 0 : index
    %1 = vector.load %arg2[%c0_1, %c0_2] : memref<128x256xf32, #tpu.memory_space<vmem>>, vector<128x256xf32>
    %cst = arith.constant dense<0.000000e+00> : vector<18x256xf32>
    %2 = tpu.matmul %0, %1, %cst {dimension_numbers = #tpu.dot_dimension_numbers<[1], [0], [0], [1], [0, 0, 1, 1], [], []>} : vector<18x128xf32>, vector<128x256xf32>, vector<18x256xf32> -> vector<18x256xf32>
    %3 = vector.extract_strided_slice %2 {offsets = [0, 0], sizes = [18, 128], strides = [1, 1]} : vector<18x256xf32> to vector<18x128xf32>
    %4 = vector.extract_strided_slice %2 {offsets = [0, 128], sizes = [18, 128], strides = [1, 1]} : vector<18x256xf32> to vector<18x128xf32>
    %5 = arith.mulf %3, %3 : vector<18x128xf32>
    %6 = arith.mulf %4, %4 : vector<18x128xf32>
    %7 = arith.addf %5, %6 : vector<18x128xf32>
    %8 = math.sqrt %7 : vector<18x128xf32>
    %cst_3 = arith.constant 0.0883883461 : f32
    %9 = vector.broadcast %cst_3 : f32 to vector<18x128xf32>
    %10 = arith.mulf %8, %9 : vector<18x128xf32>
    %11 = arith.truncf %10 : vector<18x128xf32> to vector<18x128xbf16>
    %c0_4 = arith.constant 0 : index
    %c0_5 = arith.constant 0 : index
    %12 = vector.load %arg3[%c0_4, %c0_5] : memref<18x128xbf16, #tpu.memory_space<vmem>>, vector<18x128xbf16>
    tpu.vector_store %arg3[%c0_4, %c0_5], %11 {strides = array<i32>} : memref<18x128xbf16, #tpu.memory_space<vmem>>, vector<18x128xbf16>,
    return
  }
  func.func @transform_0(%arg0: i32) -> (i32, i32) {
    %c0_i32 = arith.constant 0 : i32
    %c0_i32_0 = arith.constant 0 : i32
    return %arg0, %c0_i32 : i32, i32
  }
  func.func @transform_1(%arg0: i32) -> (i32, i32) {
    %c0_i32 = arith.constant 0 : i32
    %c0_i32_0 = arith.constant 0 : i32
    %c0_i32_1 = arith.constant 0 : i32
    return %c0_i32, %c0_i32_0 : i32, i32
  }
  func.func @transform_2(%arg0: i32) -> (i32, i32) {
    %c0_i32 = arith.constant 0 : i32
    %c0_i32_0 = arith.constant 0 : i32
    return %arg0, %c0_i32 : i32, i32
  }
}

</mosaic_0001>

<llo_original>
// kernel: tpu_custom_call.1
$region0: #{tpu_custom_call.1}
  #allocation0 [shape = 'u32[]', space=smem, size = 0x4, offset = 0x4, fixed_abs, tag = 'smem constant byte address 0x4 - core index']
  #allocation1 [shape = 'u32[144,128]{1,0:T(1,128)}', space=vmem, size = 0x12000, scoped, tag = 'internal scratch']
  %s0 = inlined_call_operand.hbm [shape: f32[18,128], index: 0, kind: input, shape index: {}]
  %s1 = inlined_call_operand.hbm [shape: f32[128,256], index: 1, kind: input, shape index: {}]
  %s2 = inlined_call_operand.hbm [shape: bf16[18,128], index: 2, kind: output, shape index: {}]
  %s3 = sld [smem:[#allocation0]]
  $region26: #{tpu_custom_call.1} parent=0
    _
  %s5 = ssub.s32 1, %s3
  %s6 = scalar_select 0, %s5, %s3
  $region1: #{tpu_custom_call.1} parent=0
    #allocation2 [shape = 'u8[12288]{0}', space=vmem, size = 0x3000, scoped, tag = 'input window, operand 0, single buffered']
    #allocation3 [shape = 's32[1]{0}', space=sflag, size = 0x4, scoped, tag = 'scoped memory for tpu_custom_call.1']
    #allocation4 [shape = 's32[1]{0}', space=sflag, size = 0x4, scoped, tag = 'scoped memory for tpu_custom_call.1']
    #allocation5 [shape = 'u8[131072]{0}', space=vmem, size = 0x20000, scoped, tag = 'input window, operand 1, single buffered']
    #allocation6 [shape = 's32[1]{0}', space=sflag, size = 0x4, scoped, tag = 'scoped memory for tpu_custom_call.1']
    #allocation7 [shape = 'u8[6144]{0}', space=vmem, size = 0x1800, scoped, tag = 'output window, operand 0, single buffered']
    %7 = vsyncpa [#allocation3], 0
    %8 = vsyncpa [#allocation6], 0
    %9 = vsyncpa [#allocation4], 0
    // Predicated region
    $region2: #{tpu_custom_call.1} parent=1 // pred_check
      _
    $region3: #{tpu_custom_call.1} parent=1 // pred_check_branch
      %11 = sbr.rel (0) target = $region5
    $region4: #{tpu_custom_call.1} parent=1 // pred_region
      %s13 = ssub.s32 384, 384
      %14 = vsyncadd [#allocation3], %s13
      %s15 = sshll.u32 [#allocation2], 4
      %s16 = int_to_ptr.vmem [resolvable:$true] %s15
      %21 = dma.hbm_to_vmem [thread:$0]  %s0, 384, %s16, [#allocation3], 128, 128, 8
    $region5: #{tpu_custom_call.1} parent=1 // pred_fallthru
      _
    // Predicated region
    $region6: #{tpu_custom_call.1} parent=1 // pred_check
      _
    $region7: #{tpu_custom_call.1} parent=1 // pred_check_branch
      %23 = sbr.rel (0) target = $region9
    $region8: #{tpu_custom_call.1} parent=1 // pred_region
      %s25 = ssub.s32 4096, 4096
      %26 = vsyncadd [#allocation6], %s25
      %s27 = sshll.u32 [#allocation5], 4
      %s28 = int_to_ptr.vmem [resolvable:$true] %s27
      %33 = dma.hbm_to_vmem [thread:$0]  %s1, 4096, %s28, [#allocation6], 256, 256, 16
    $region9: #{tpu_custom_call.1} parent=1 // pred_fallthru
      _
    // Predicated region
    $region10: #{tpu_custom_call.1} parent=1 // pred_check
      _
    $region11: #{tpu_custom_call.1} parent=1 // pred_check_branch
      %35 = sbr.rel (0) target = $region13
    $region12: #{tpu_custom_call.1} parent=1 // pred_region
      %36 = dma.done [#allocation3], 384
    $region13: #{tpu_custom_call.1} parent=1 // pred_fallthru
      _
    // Predicated region
    $region14: #{tpu_custom_call.1} parent=1 // pred_check
      _
    $region15: #{tpu_custom_call.1} parent=1 // pred_check_branch
      %38 = sbr.rel (0) target = $region17
    $region16: #{tpu_custom_call.1} parent=1 // pred_region
      %39 = dma.done [#allocation6], 4096
    $region17: #{tpu_custom_call.1} parent=1 // pred_fallthru
      _
    %v40 = vld [vmem:[#allocation2] sm:$0xff]
    %v41 = vld [vmem:[#allocation2 + $0x8] sm:$0xff]
    %v42 = vld [vmem:[#allocation2 + $0x10] sm:$0x3]
    %v43 = vld [vmem:[#allocation5] sm:$0xff]
    %v44 = vld [vmem:[#allocation5 + $0x8] sm:$0xff]
    %v45 = vld [vmem:[#allocation5 + $0x10] sm:$0xff]
    %v46 = vld [vmem:[#allocation5 + $0x18] sm:$0xff]
    %v47 = vld [vmem:[#allocation5 + $0x20] sm:$0xff]
    %v48 = vld [vmem:[#allocation5 + $0x28] sm:$0xff]
    %v49 = vld [vmem:[#allocation5 + $0x30] sm:$0xff]
    %v50 = vld [vmem:[#allocation5 + $0x38] sm:$0xff]
    %v51 = vld [vmem:[#allocation5 + $0x40] sm:$0xff]
    %v52 = vld [vmem:[#allocation5 + $0x48] sm:$0xff]
    %v53 = vld [vmem:[#allocation5 + $0x50] sm:$0xff]
    %v54 = vld [vmem:[#allocation5 + $0x58] sm:$0xff]
    %v55 = vld [vmem:[#allocation5 + $0x60] sm:$0xff]
    %v56 = vld [vmem:[#allocation5 + $0x68] sm:$0xff]
    %v57 = vld [vmem:[#allocation5 + $0x70] sm:$0xff]
    %v58 = vld [vmem:[#allocation5 + $0x78] sm:$0xff]
    %v59 = vld [vmem:[#allocation5 + $0x80] sm:$0xff]
    %v60 = vld [vmem:[#allocation5 + $0x88] sm:$0xff]
    %v61 = vld [vmem:[#allocation5 + $0x90] sm:$0xff]
    %v62 = vld [vmem:[#allocation5 + $0x98] sm:$0xff]
    %v63 = vld [vmem:[#allocation5 + $0xa0] sm:$0xff]
    %v64 = vld [vmem:[#allocation5 + $0xa8] sm:$0xff]
    %v65 = vld [vmem:[#allocation5 + $0xb0] sm:$0xff]
    %v66 = vld [vmem:[#allocation5 + $0xb8] sm:$0xff]
    %v67 = vld [vmem:[#allocation5 + $0xc0] sm:$0xff]
    %v68 = vld [vmem:[#allocation5 + $0xc8] sm:$0xff]
    %v69 = vld [vmem:[#allocation5 + $0xd0] sm:$0xff]
    %v70 = vld [vmem:[#allocation5 + $0xd8] sm:$0xff]
    %v71 = vld [vmem:[#allocation5 + $0xe0] sm:$0xff]
    %v72 = vld [vmem:[#allocation5 + $0xe8] sm:$0xff]
    %v73 = vld [vmem:[#allocation5 + $0xf0] sm:$0xff]
    %v74 = vld [vmem:[#allocation5 + $0xf8] sm:$0xff]
    %75 = vmatprep.subr.mxu0 %v74
    %76 = vmatpush1.msra.mxu0 %v73
    %77 = vmatprep.subr.mxu0 %v72
    %78 = vmatpush1.msra.mxu0 %v71
    %79 = vmatprep.subr.mxu0 %v70
    %80 = vmatpush1.msra.mxu0 %v69
    %81 = vmatprep.subr.mxu0 %v68
    %82 = vmatpush1.msra.mxu0 %v67
    %83 = vmatprep.subr.mxu0 %v66
    %84 = vmatpush1.msra.mxu0 %v65
    %85 = vmatprep.subr.mxu0 %v64
    %86 = vmatpush1.msra.mxu0 %v63
    %87 = vmatprep.subr.mxu0 %v62
    %88 = vmatpush1.msra.mxu0 %v61
    %89 = vmatprep.subr.mxu0 %v60
    %90 = vmatpush1.msra.mxu0 %v59
    %91 = vmatprep.subr.mxu0 %v58
    %92 = vmatpush1.msra.mxu0 %v57
    %93 = vmatprep.subr.mxu0 %v56
    %94 = vmatpush1.msra.mxu0 %v55
    %95 = vmatprep.subr.mxu0 %v54
    %96 = vmatpush1.msra.mxu0 %v53
    %97 = vmatprep.subr.mxu0 %v52
    %98 = vmatpush1.msra.mxu0 %v51
    %99 = vmatprep.subr.mxu0 %v50
    %100 = vmatpush1.msra.mxu0 %v49
    %101 = vmatprep.subr.mxu0 %v48
    %102 = vmatpush1.msra.mxu0 %v47
    %103 = vmatprep.subr.mxu0 %v46
    %104 = vmatpush1.msra.mxu0 %v45
    %105 = vmatprep.subr.mxu0 %v44
    %106 = vmatpush1.msra.mxu0 %v43
    %107 = vmatprep.subr.mxu0 0.0
    %108 = vmatpush2.msra.mxu0 0.0
    %109 = vmatprep.subr.mxu0 0.0
    %110 = vmatpush2.msra.mxu0 0.0
    %111 = vmatprep.subr.mxu0 0.0
    %112 = vmatpush2.msra.mxu0 0.0
    %113 = vmatprep.subr.mxu0 0.0
    %114 = vmatpush2.msra.mxu0 0.0
    %115 = vmatprep.subr.mxu0 0.0
    %116 = vmatpush2.msra.mxu0 0.0
    %117 = vmatprep.subr.mxu0 0.0
    %118 = vmatpush2.msra.mxu0 0.0
    %119 = vmatprep.subr.mxu0 0.0
    %120 = vmatpush2.msra.mxu0 0.0
    %121 = vmatprep.subr.mxu0 0.0
    %122 = vmatpush2.msra.mxu0 0.0
    %123 = vmatprep.subr.mxu0 0.0
    %124 = vmatpush2.msra.mxu0 0.0
    %125 = vmatprep.subr.mxu0 0.0
    %126 = vmatpush2.msra.mxu0 0.0
    %127 = vmatprep.subr.mxu0 0.0
    %128 = vmatpush2.msra.mxu0 0.0
    %129 = vmatprep.subr.mxu0 0.0
    %130 = vmatpush2.msra.mxu0 0.0
    %131 = vmatprep.subr.mxu0 0.0
    %132 = vmatpush2.msra.mxu0 0.0
    %133 = vmatprep.subr.mxu0 0.0
    %134 = vmatpush2.msra.mxu0 0.0
    %135 = vmatprep.subr.mxu0 0.0
    %136 = vmatpush2.msra.mxu0 0.0
    %137 = vmatprep.subr.mxu0 0.0
    %138 = vmatpush2.msra.mxu0 0.0
    %139 = vmatprep.mubr.f32.mxu0 0.0
    %140 = vmatmul.mubr.f32.gmra.mxu0 %v40
    %v141 = vpop.f32.mrf.mxu0
    %v142 = vadd.f32 0.0, %v141
    %v143 = vpop.f32.mrf.mxu0
    %v144 = vadd.f32 0.0, %v143
    %145 = vmatprep.mubr.f32.mxu0 0.0
    %146 = vmatmul.mubr.f32.gmra.mxu0 %v41
    %v147 = vpop.f32.mrf.mxu0
    %v148 = vadd.f32 0.0, %v147
    %v149 = vpop.f32.mrf.mxu0
    %v150 = vadd.f32 0.0, %v149
    %151 = vmatprep.mubr.f32.mxu0 0.0
    %152 = vmatmul.mubr.f32.gmra.mxu0 %v42
    %v153 = vpop.f32.mrf.mxu0
    %v154 = vadd.f32 0.0, %v153
    %v155 = vpop.f32.mrf.mxu0
    %v156 = vadd.f32 0.0, %v155
    %157 = vdwg.mxu0
    %v158 = vmul.f32 %v142, %v142
    %v159 = vmul.f32 %v148, %v148
    %v160 = vmul.f32 %v154, %v154
    %v161 = vmul.f32 %v144, %v144
    %v162 = vmul.f32 %v150, %v150
    %v163 = vmul.f32 %v156, %v156
    %v164 = vadd.f32 %v158, %v161
    %v165 = vadd.f32 %v159, %v162
    %v166 = vadd.f32 %v160, %v163
    %v167 = vrsqrt.pop %v164
    %v168 = vmul.f32 %v164, %v167
    %vm169 = vcmp.eq.f32.partialorder %v164, inf
    %v170 = vsel %vm169, %v164, %v168
    %vm171 = vcmp.eq.f32.partialorder %v164, 0.0
    %v172 = vand.u32 %v164, 2147483648
    %v173 = vsel %vm171, %v172, %v170
    %v174 = vrsqrt.pop %v165
    %v175 = vmul.f32 %v165, %v174
    %vm176 = vcmp.eq.f32.partialorder %v165, inf
    %v177 = vsel %vm176, %v165, %v175
    %vm178 = vcmp.eq.f32.partialorder %v165, 0.0
    %v179 = vand.u32 %v165, 2147483648
    %v180 = vsel %vm178, %v179, %v177
    %v181 = vrsqrt.pop %v166
    %v182 = vmul.f32 %v166, %v181
    %vm183 = vcmp.eq.f32.partialorder %v166, inf
    %v184 = vsel %vm183, %v166, %v182
    %vm185 = vcmp.eq.f32.partialorder %v166, 0.0
    %v186 = vand.u32 %v166, 2147483648
    %v187 = vsel %vm185, %v186, %v184
    %v188 = vmul.f32 %v173, 0.088388346
    %v189 = vmul.f32 %v180, 0.088388346
    %v190 = vmul.f32 %v187, 0.088388346
    %v191 = vpack.c.bf16 %v189, %v188
    %v192 = vpack.c.bf16 %v190, %v190
    %v195 = vunpack.c.l.b16 %v191
    %v196 = vunpack.c.h.b16 %v191
    %v197 = vunpack.c.l.b16 %v192
    %v198 = vpack.c.b16 %v195, %v195
    %v199 = vpack.c.b16 %v196, %v196
    %v200 = vpack.c.b16 %v197, %v197
    %204 = vst [vmem:[#allocation7] sm:$0xf] %v198
    %205 = vst [vmem:[#allocation7 + $0x4] sm:$0xf] %v199
    %206 = vst [vmem:[#allocation7 + $0x8] sm:$0x1] %v200
    // Predicated region
    $region18: #{tpu_custom_call.1} parent=1 // pred_check
      _
    $region19: #{tpu_custom_call.1} parent=1 // pred_check_branch
      %208 = sbr.rel (0) target = $region21
    $region20: #{tpu_custom_call.1} parent=1 // pred_region
      %s210 = ssub.s32 192, 192
      %211 = vsyncadd [#allocation4], %s210
      %s212 = sshll.u32 [#allocation7], 4
      %s213 = int_to_ptr.vmem [resolvable:$true] %s212
      %218 = dma.vmem_to_hbm [thread:$0]  %s213, 192, %s2, [#allocation4], 64, 64, 4
    $region21: #{tpu_custom_call.1} parent=1 // pred_fallthru
      _
    // Predicated region
    $region22: #{tpu_custom_call.1} parent=1 // pred_check
      _
    $region23: #{tpu_custom_call.1} parent=1 // pred_check_branch
      %220 = sbr.rel (0) target = $region25
    $region24: #{tpu_custom_call.1} parent=1 // pred_region
      %221 = dma.done [#allocation4], 192
    $region25: #{tpu_custom_call.1} parent=1 // pred_fallthru
      _
    %222 = vsyncpa [#allocation3], 1
    %223 = vsyncpa [#allocation6], 1
    %224 = vsyncpa [#allocation4], 1

</llo_original>
